<compile_context>
chip_gen: v5e
topology: v5e:2x2
jax: 0.10.0
libtpu: 0.0.40
codegen_flags: <defaults>
</compile_context>

<pallas_src>
import jax
import jax.numpy as jnp
from jax.experimental import pallas as pl
from jax.experimental.pallas import tpu as pltpu


def _round_up(n, m):
    return ((n + m - 1) // m) * m


def encoder_kernel(x_ref, w1_ref, b1_ref, w2_ref, b2_ref, w3_ref, b3_ref, o_ref):
    """Fused 3-layer MLP on one batch tile (weights resident in VMEM)."""
    x = x_ref[...].astype(w1_ref.dtype)                               # in-kernel cast (free, under DMA)
    h1 = jnp.dot(x, w1_ref[...], preferred_element_type=jnp.float32)
    h1 = jnp.maximum(h1 + b1_ref[...], 0.0).astype(w2_ref.dtype)      # bias+ReLU in f32 on VPU
    h2 = jnp.dot(h1, w2_ref[...], preferred_element_type=jnp.float32)
    h2 = jnp.maximum(h2 + b2_ref[...], 0.0).astype(w3_ref.dtype)
    out = jnp.dot(h2, w3_ref[...], preferred_element_type=jnp.float32) + b3_ref[...]
    o_ref[...] = out.astype(o_ref.dtype)


def prepare_params(params, compute_dtype=jnp.bfloat16):
    """One-time conversion: weights -> compute dtype, biases -> f32 row vectors.

    Do this once (at init / checkpoint load), NOT per forward call."""
    prep = {}
    for i in (1, 2, 3):
        prep[f"w{i}"] = jnp.asarray(params[f"w{i}"], compute_dtype)
        prep[f"b{i}"] = jnp.asarray(params[f"b{i}"], jnp.float32).reshape(1, -1)
    return prep


def encoder_forward(x, prepared, *, tb=None, tc_count=1):
    """x: [B, input_dim] (any float dtype). prepared: output of prepare_params().

    tc_count: TensorCores per chip sharing the grid (1 for v5e/v6e, 2 for v7x)."""
    B, D = x.shape
    out_dtype = x.dtype
    w1, b1, w2, b2, w3, b3 = (prepared[k] for k in ("w1", "b1", "w2", "b2", "w3", "b3"))
    H1, H2, L = w1.shape[1], w2.shape[1], w3.shape[1]

    # Batch tile: 8-aligned, cap 1024.  Single grid step on single-TC chips for
    # small/medium B; on multi-TC chips make the step count a multiple of tc_count.
    cap = 1024
    if tb is None:
        tb = min(_round_up(B, 8), cap)
        if tc_count > 1 and B > 8 * tc_count:
            steps = max(tc_count, _round_up(pl.cdiv(B, tb), tc_count))
            tb = max(8, _round_up(pl.cdiv(B, steps), 8))
    tb = max(8, _round_up(tb, 8))
    Bp = _round_up(B, tb)

    # Only pad the batch when the last tile is ragged (wasted rows are discarded).
    if Bp != B:
        x = jnp.pad(x, ((0, Bp - B), (0, 0)))

    grid = (Bp // tb,)
    resident = lambda i: (0, 0)  # weights/biases: same block every step -> DMA'd once

    itemsize = lambda a: jnp.dtype(a.dtype).itemsize
    flops = 2 * Bp * (D * H1 + H1 * H2 + H2 * L)
    bytes_accessed = (
        Bp * D * itemsize(x)
        + sum(int(a.size) * itemsize(a) for a in (w1, b1, w2, b2, w3, b3))
        + Bp * L * jnp.dtype(out_dtype).itemsize
    )

    out = pl.pallas_call(
        encoder_kernel,
        out_shape=jax.ShapeDtypeStruct((Bp, L), out_dtype),
        grid=grid,
        in_specs=[
            pl.BlockSpec((tb, D), lambda i: (i, 0)),  # x tile over batch (streamed)
            pl.BlockSpec((D, H1), resident),          # W1
            pl.BlockSpec((1, H1), resident),          # b1 (f32)
            pl.BlockSpec((H1, H2), resident),         # W2
            pl.BlockSpec((1, H2), resident),          # b2 (f32)
            pl.BlockSpec((H2, L), resident),          # W3
            pl.BlockSpec((1, L), resident),           # b3 (f32)
        ],
        out_specs=pl.BlockSpec((tb, L), lambda i: (i, 0)),  # unpadded (Bp, L) result
        compiler_params=pltpu.CompilerParams(
            dimension_semantics=("parallel",),
        ),
        cost_estimate=pl.CostEstimate(
            flops=flops, transcendentals=0, bytes_accessed=bytes_accessed
        ),
    )(x, w1, b1, w2, b2, w3, b3)

    return out if Bp == B else out[:B]


def init_params(key, input_dim, latent_dim, dtype=jnp.float32):
    """Synthetic init matching nn.Linear shapes (weights stored as [in, out])."""
    dims = [(input_dim, 128), (128, 64), (64, latent_dim)]
    params = {}
    for idx, (din, dout) in enumerate(dims, start=1):
        key, kw, kb = jax.random.split(key, 3)
        bound = 1.0 / (din ** 0.5)  # PyTorch default uniform(-1/sqrt(in), 1/sqrt(in))
        params[f"w{idx}"] = jax.random.uniform(kw, (din, dout), dtype, -bound, bound)
        params[f"b{idx}"] = jax.random.uniform(kb, (1, dout), dtype, -bound, bound)
    return params


def encoder_reference(x, params):
    h1 = jnp.maximum(x @ params["w1"] + params["b1"], 0.0)
    h2 = jnp.maximum(h1 @ params["w2"] + params["b2"], 0.0)
    return h2 @ params["w3"] + params["b3"]


if __name__ == "__main__":
    key = jax.random.PRNGKey(0)
    INPUT_DIM, LATENT_DIM = 32, 16
    kx, kx2, kp = jax.random.split(key, 3)
    params = init_params(kp, INPUT_DIM, LATENT_DIM)

    prepared_f32 = prepare_params(params, compute_dtype=jnp.float32)
    prepared_bf16 = prepare_params(params)  # default bf16 operands, f32 accumulation

    # Small shape, f32 compute path (validates kernel math against the reference).
    x = jax.random.normal(kx, (8, INPUT_DIM), jnp.float32)
    ref = encoder_reference(x, params)
    out_f32 = jax.block_until_ready(encoder_forward(x, prepared_f32))
    assert out_f32.shape == (8, LATENT_DIM)
    assert jnp.allclose(out_f32, ref, atol=1e-3, rtol=1e-3)

    # Default bf16-operand path (looser tolerance: precision, not a bug).
    out_bf16 = jax.block_until_ready(encoder_forward(x, prepared_bf16))
    assert jnp.allclose(out_bf16, ref, atol=5e-2, rtol=5e-2)

    # Ragged batch + multi-step grid (B=40, tb=16 -> Bp=48, grid=(3,), padded rows sliced off).
    x2 = jax.random.normal(kx2, (40, INPUT_DIM), jnp.float32)
    out2 = jax.block_until_ready(encoder_forward(x2, prepared_bf16, tb=16))
    ref2 = encoder_reference(x2, params)
    assert out2.shape == (40, LATENT_DIM)
    assert jnp.allclose(out2, ref2, atol=5e-2, rtol=5e-2)

    # v7x-style even-step split (tc_count=2): default tb chosen so grid steps are even.
    out3 = jax.block_until_ready(encoder_forward(x2, prepared_bf16, tc_count=2))
    assert out3.shape == (40, LATENT_DIM)
    assert jnp.allclose(out3, ref2, atol=5e-2, rtol=5e-2)

    print("KERNEL_OK")
</pallas_src>

<mosaic_0001>
module attributes {stable_mosaic.version = 11 : i64} {
  func.func @encoder_kernel(%arg0: i32, %arg1: memref<8x32xf32, #tpu.memory_space<vmem>>, %arg2: memref<32x128xf32, #tpu.memory_space<vmem>>, %arg3: memref<1x128xf32, #tpu.memory_space<vmem>>, %arg4: memref<128x64xf32, #tpu.memory_space<vmem>>, %arg5: memref<1x64xf32, #tpu.memory_space<vmem>>, %arg6: memref<64x16xf32, #tpu.memory_space<vmem>>, %arg7: memref<1x16xf32, #tpu.memory_space<vmem>>, %arg8: memref<8x16xf32, #tpu.memory_space<vmem>>) attributes {dimension_semantics = [#tpu.dimension_semantics<parallel>], iteration_bounds = array<i64: 1>, scalar_prefetch = 0 : i64, scratch_operands = 0 : i64, tpu.core_type = #tpu.core_type<tc>, window_params = [{transform_indices = @transform_0, window_bounds = array<i64: 8, 32>}, {pipeline_mode = #tpu.pipeline_mode<synchronous>, transform_indices = @transform_1, window_bounds = array<i64: 32, 128>}, {pipeline_mode = #tpu.pipeline_mode<synchronous>, transform_indices = @transform_2, window_bounds = array<i64: 1, 128>}, {pipeline_mode = #tpu.pipeline_mode<synchronous>, transform_indices = @transform_3, window_bounds = array<i64: 128, 64>}, {pipeline_mode = #tpu.pipeline_mode<synchronous>, transform_indices = @transform_4, window_bounds = array<i64: 1, 64>}, {pipeline_mode = #tpu.pipeline_mode<synchronous>, transform_indices = @transform_5, window_bounds = array<i64: 64, 16>}, {pipeline_mode = #tpu.pipeline_mode<synchronous>, transform_indices = @transform_6, window_bounds = array<i64: 1, 16>}, {transform_indices = @transform_7, window_bounds = array<i64: 8, 16>}]} {
    %c0 = arith.constant 0 : index
    %c0_0 = arith.constant 0 : index
    %0 = vector.load %arg1[%c0, %c0_0] : memref<8x32xf32, #tpu.memory_space<vmem>>, vector<8x32xf32>
    %c0_1 = arith.constant 0 : index
    %c0_2 = arith.constant 0 : index
    %1 = vector.load %arg2[%c0_1, %c0_2] : memref<32x128xf32, #tpu.memory_space<vmem>>, vector<32x128xf32>
    %cst = arith.constant dense<0.000000e+00> : vector<8x128xf32>
    %2 = tpu.matmul %0, %1, %cst {dimension_numbers = #tpu.dot_dimension_numbers<[1], [0], [0], [1], [0, 0, 1, 1], [], []>} : vector<8x32xf32>, vector<32x128xf32>, vector<8x128xf32> -> vector<8x128xf32>
    %c0_3 = arith.constant 0 : index
    %c0_4 = arith.constant 0 : index
    %3 = vector.load %arg3[%c0_3, %c0_4] : memref<1x128xf32, #tpu.memory_space<vmem>>, vector<1x128xf32>
    %4 = vector.broadcast %3 : vector<1x128xf32> to vector<8x128xf32>
    %5 = arith.addf %2, %4 : vector<8x128xf32>
    %cst_5 = arith.constant 0.000000e+00 : f32
    %6 = vector.broadcast %cst_5 : f32 to vector<8x128xf32>
    %7 = arith.maximumf %5, %6 : vector<8x128xf32>
    %c0_6 = arith.constant 0 : index
    %c0_7 = arith.constant 0 : index
    %8 = vector.load %arg4[%c0_6, %c0_7] : memref<128x64xf32, #tpu.memory_space<vmem>>, vector<128x64xf32>
    %cst_8 = arith.constant dense<0.000000e+00> : vector<8x64xf32>
    %9 = tpu.matmul %7, %8, %cst_8 {dimension_numbers = #tpu.dot_dimension_numbers<[1], [0], [0], [1], [0, 0, 1, 1], [], []>} : vector<8x128xf32>, vector<128x64xf32>, vector<8x64xf32> -> vector<8x64xf32>
    %c0_9 = arith.constant 0 : index
    %c0_10 = arith.constant 0 : index
    %10 = vector.load %arg5[%c0_9, %c0_10] : memref<1x64xf32, #tpu.memory_space<vmem>>, vector<1x64xf32>
    %11 = vector.broadcast %10 : vector<1x64xf32> to vector<8x64xf32>
    %12 = arith.addf %9, %11 : vector<8x64xf32>
    %cst_11 = arith.constant 0.000000e+00 : f32
    %13 = vector.broadcast %cst_11 : f32 to vector<8x64xf32>
    %14 = arith.maximumf %12, %13 : vector<8x64xf32>
    %c0_12 = arith.constant 0 : index
    %c0_13 = arith.constant 0 : index
    %15 = vector.load %arg6[%c0_12, %c0_13] : memref<64x16xf32, #tpu.memory_space<vmem>>, vector<64x16xf32>
    %cst_14 = arith.constant dense<0.000000e+00> : vector<8x16xf32>
    %16 = tpu.matmul %14, %15, %cst_14 {dimension_numbers = #tpu.dot_dimension_numbers<[1], [0], [0], [1], [0, 0, 1, 1], [], []>} : vector<8x64xf32>, vector<64x16xf32>, vector<8x16xf32> -> vector<8x16xf32>
    %c0_15 = arith.constant 0 : index
    %c0_16 = arith.constant 0 : index
    %17 = vector.load %arg7[%c0_15, %c0_16] : memref<1x16xf32, #tpu.memory_space<vmem>>, vector<1x16xf32>
    %18 = vector.broadcast %17 : vector<1x16xf32> to vector<8x16xf32>
    %19 = arith.addf %16, %18 : vector<8x16xf32>
    %c0_17 = arith.constant 0 : index
    %c0_18 = arith.constant 0 : index
    %20 = vector.load %arg8[%c0_17, %c0_18] : memref<8x16xf32, #tpu.memory_space<vmem>>, vector<8x16xf32>
    tpu.vector_store %arg8[%c0_17, %c0_18], %19 {strides = array<i32>} : memref<8x16xf32, #tpu.memory_space<vmem>>, vector<8x16xf32>,
    return
  }
  func.func @transform_0(%arg0: i32) -> (i32, i32) {
    %c0_i32 = arith.constant 0 : i32
    %c0_i32_0 = arith.constant 0 : i32
    return %arg0, %c0_i32 : i32, i32
  }
  func.func @transform_1(%arg0: i32) -> (i32, i32) {
    %c0_i32 = arith.constant 0 : i32
    %c0_i32_0 = arith.constant 0 : i32
    %c0_i32_1 = arith.constant 0 : i32
    return %c0_i32, %c0_i32_0 : i32, i32
  }
  func.func @transform_2(%arg0: i32) -> (i32, i32) {
    %c0_i32 = arith.constant 0 : i32
    %c0_i32_0 = arith.constant 0 : i32
    %c0_i32_1 = arith.constant 0 : i32
    return %c0_i32, %c0_i32_0 : i32, i32
  }
  func.func @transform_3(%arg0: i32) -> (i32, i32) {
    %c0_i32 = arith.constant 0 : i32
    %c0_i32_0 = arith.constant 0 : i32
    %c0_i32_1 = arith.constant 0 : i32
    return %c0_i32, %c0_i32_0 : i32, i32
  }
  func.func @transform_4(%arg0: i32) -> (i32, i32) {
    %c0_i32 = arith.constant 0 : i32
    %c0_i32_0 = arith.constant 0 : i32
    %c0_i32_1 = arith.constant 0 : i32
    return %c0_i32, %c0_i32_0 : i32, i32
  }
  func.func @transform_5(%arg0: i32) -> (i32, i32) {
    %c0_i32 = arith.constant 0 : i32
    %c0_i32_0 = arith.constant 0 : i32
    %c0_i32_1 = arith.constant 0 : i32
    return %c0_i32, %c0_i32_0 : i32, i32
  }
  func.func @transform_6(%arg0: i32) -> (i32, i32) {
    %c0_i32 = arith.constant 0 : i32
    %c0_i32_0 = arith.constant 0 : i32
    %c0_i32_1 = arith.constant 0 : i32
    return %c0_i32, %c0_i32_0 : i32, i32
  }
  func.func @transform_7(%arg0: i32) -> (i32, i32) {
    %c0_i32 = arith.constant 0 : i32
    %c0_i32_0 = arith.constant 0 : i32
    return %arg0, %c0_i32 : i32, i32
  }
}

</mosaic_0001>

<llo_original>
// kernel: tpu_custom_call.1
$region0: #{tpu_custom_call.1}
  #allocation0 [shape = 'u32[]', space=smem, size = 0x4, offset = 0x4, fixed_abs, tag = 'smem constant byte address 0x4 - core index']
  #allocation1 [shape = 'u32[72,128]{1,0:T(1,128)}', space=vmem, size = 0x9000, scoped, tag = 'internal scratch']
  %s0 = inlined_call_operand.vmem [shape: f32[8,32], index: 0, kind: input, shape index: {}]
  %s1 = inlined_call_operand.vmem [shape: f32[32,128], index: 1, kind: input, shape index: {}]
  %s2 = inlined_call_operand.vmem [shape: f32[1,128], index: 2, kind: input, shape index: {}]
  %s3 = inlined_call_operand.vmem [shape: f32[128,64], index: 3, kind: input, shape index: {}]
  %s4 = inlined_call_operand.vmem [shape: f32[1,64], index: 4, kind: input, shape index: {}]
  %s5 = inlined_call_operand.vmem [shape: f32[64,16], index: 5, kind: input, shape index: {}]
  %s6 = inlined_call_operand.vmem [shape: f32[1,16], index: 6, kind: input, shape index: {}]
  %s7 = inlined_call_operand.hbm [shape: f32[8,16], index: 7, kind: output, shape index: {}]
  %s8 = sld [smem:[#allocation0]]
  $region38: #{tpu_custom_call.1} parent=0
    _
  %s10 = ssub.s32 1, %s8
  %s11 = scalar_select 0, %s10, %s8
  $region1: #{tpu_custom_call.1} parent=0
    #allocation2 [shape = 'u8[4096]{0}', space=vmem, size = 0x1000, scoped, tag = 'output window, operand 0, single buffered']
    #allocation3 [shape = 's32[1]{0}', space=sflag, size = 0x4, scoped, tag = 'scoped memory for tpu_custom_call.1']
    %12 = vsyncpa [#allocation3], 0
    // Predicated region
    $region2: #{tpu_custom_call.1} parent=1 // pred_check
      _
    $region3: #{tpu_custom_call.1} parent=1 // pred_check_branch
      %14 = sbr.rel (0) target = $region5
    $region4: #{tpu_custom_call.1} parent=1 // pred_region
      _
    $region5: #{tpu_custom_call.1} parent=1 // pred_fallthru
      _
    // Predicated region
    $region6: #{tpu_custom_call.1} parent=1 // pred_check
      _
    $region7: #{tpu_custom_call.1} parent=1 // pred_check_branch
      %16 = sbr.rel (0) target = $region9
    $region8: #{tpu_custom_call.1} parent=1 // pred_region
      _
    $region9: #{tpu_custom_call.1} parent=1 // pred_fallthru
      _
    // Predicated region
    $region10: #{tpu_custom_call.1} parent=1 // pred_check
      _
    $region11: #{tpu_custom_call.1} parent=1 // pred_check_branch
      %18 = sbr.rel (0) target = $region13
    $region12: #{tpu_custom_call.1} parent=1 // pred_region
      _
    $region13: #{tpu_custom_call.1} parent=1 // pred_fallthru
      _
    // Predicated region
    $region14: #{tpu_custom_call.1} parent=1 // pred_check
      _
    $region15: #{tpu_custom_call.1} parent=1 // pred_check_branch
      %20 = sbr.rel (0) target = $region17
    $region16: #{tpu_custom_call.1} parent=1 // pred_region
      _
    $region17: #{tpu_custom_call.1} parent=1 // pred_fallthru
      _
    // Predicated region
    $region18: #{tpu_custom_call.1} parent=1 // pred_check
      _
    $region19: #{tpu_custom_call.1} parent=1 // pred_check_branch
      %22 = sbr.rel (0) target = $region21
    $region20: #{tpu_custom_call.1} parent=1 // pred_region
      _
    $region21: #{tpu_custom_call.1} parent=1 // pred_fallthru
      _
    // Predicated region
    $region22: #{tpu_custom_call.1} parent=1 // pred_check
      _
    $region23: #{tpu_custom_call.1} parent=1 // pred_check_branch
      %24 = sbr.rel (0) target = $region25
    $region24: #{tpu_custom_call.1} parent=1 // pred_region
      _
    $region25: #{tpu_custom_call.1} parent=1 // pred_fallthru
      _
    // Predicated region
    $region26: #{tpu_custom_call.1} parent=1 // pred_check
      _
    $region27: #{tpu_custom_call.1} parent=1 // pred_check_branch
      %26 = sbr.rel (0) target = $region29
    $region28: #{tpu_custom_call.1} parent=1 // pred_region
      _
    $region29: #{tpu_custom_call.1} parent=1 // pred_fallthru
      _
    %v27 = vld [vmem:[%s0] sm:$0xff]
    %v28 = vld [vmem:[%s1] sm:$0xff]
    %v29 = vld [vmem:[%s1 + $0x8] sm:$0xff]
    %v30 = vld [vmem:[%s1 + $0x10] sm:$0xff]
    %v31 = vld [vmem:[%s1 + $0x18] sm:$0xff]
    %v32 = vld [vmem:[%s2] sm:$0x1]
    %v34 = vperm.slane %v32, 0
    %vm36 = vcmask 261120
    %v38 = vsel %vm36, %v27, 0
    %40 = vmatpush.msra.mxu0 0.0
    %41 = vmatpush.msra.mxu0 0.0
    %42 = vmatpush.msra.mxu0 0.0
    %43 = vmatpush.msra.mxu0 0.0
    %44 = vmatpush.msra.mxu0 0.0
    %45 = vmatpush.msra.mxu0 0.0
    %46 = vmatpush.msra.mxu0 0.0
    %47 = vmatpush.msra.mxu0 0.0
    %48 = vmatpush.msra.mxu0 0.0
    %49 = vmatpush.msra.mxu0 0.0
    %50 = vmatpush.msra.mxu0 0.0
    %51 = vmatpush.msra.mxu0 0.0
    %52 = vmatpush.msra.mxu0 %v31
    %53 = vmatpush.msra.mxu0 %v30
    %54 = vmatpush.msra.mxu0 %v29
    %55 = vmatpush.msra.mxu0 %v28
    %56 = vmatmul.f32.gmra.mxu0 %v38
    %v57 = vpop.f32.mrf.mxu0
    %v58 = vadd.f32 %v34, %v57
    %59 = vdwg.mxu0
    %v60 = vmax.f32 %v58, 0.0
    %v61 = vld [vmem:[%s3] sm:$0xff]
    %v62 = vld [vmem:[%s3 + $0x8] sm:$0xff]
    %v63 = vld [vmem:[%s3 + $0x10] sm:$0xff]
    %v64 = vld [vmem:[%s3 + $0x18] sm:$0xff]
    %v65 = vld [vmem:[%s3 + $0x20] sm:$0xff]
    %v66 = vld [vmem:[%s3 + $0x28] sm:$0xff]
    %v67 = vld [vmem:[%s3 + $0x30] sm:$0xff]
    %v68 = vld [vmem:[%s3 + $0x38] sm:$0xff]
    %v69 = vld [vmem:[%s3 + $0x40] sm:$0xff]
    %v70 = vld [vmem:[%s3 + $0x48] sm:$0xff]
    %v71 = vld [vmem:[%s3 + $0x50] sm:$0xff]
    %v72 = vld [vmem:[%s3 + $0x58] sm:$0xff]
    %v73 = vld [vmem:[%s3 + $0x60] sm:$0xff]
    %v74 = vld [vmem:[%s3 + $0x68] sm:$0xff]
    %v75 = vld [vmem:[%s3 + $0x70] sm:$0xff]
    %v76 = vld [vmem:[%s3 + $0x78] sm:$0xff]
    %v77 = vld [vmem:[%s4] sm:$0x1]
    %v79 = vperm.slane %v77, 0
    %81 = vmatpush.msra.mxu0 %v76
    %82 = vmatpush.msra.mxu0 %v75
    %83 = vmatpush.msra.mxu0 %v74
    %84 = vmatpush.msra.mxu0 %v73
    %85 = vmatpush.msra.mxu0 %v72
    %86 = vmatpush.msra.mxu0 %v71
    %87 = vmatpush.msra.mxu0 %v70
    %88 = vmatpush.msra.mxu0 %v69
    %89 = vmatpush.msra.mxu0 %v68
    %90 = vmatpush.msra.mxu0 %v67
    %91 = vmatpush.msra.mxu0 %v66
    %92 = vmatpush.msra.mxu0 %v65
    %93 = vmatpush.msra.mxu0 %v64
    %94 = vmatpush.msra.mxu0 %v63
    %95 = vmatpush.msra.mxu0 %v62
    %96 = vmatpush.msra.mxu0 %v61
    %97 = vmatmul.f32.gmra.mxu0 %v60
    %v98 = vpop.f32.mrf.mxu0
    %v99 = vadd.f32 %v79, %v98
    %100 = vdwg.mxu0
    %v101 = vmax.f32 %v99, 0.0
    %v102 = vld [vmem:[%s5] sm:$0xff]
    %v103 = vld [vmem:[%s5 + $0x8] sm:$0xff]
    %v104 = vld [vmem:[%s5 + $0x10] sm:$0xff]
    %v105 = vld [vmem:[%s5 + $0x18] sm:$0xff]
    %v106 = vld [vmem:[%s5 + $0x20] sm:$0xff]
    %v107 = vld [vmem:[%s5 + $0x28] sm:$0xff]
    %v108 = vld [vmem:[%s5 + $0x30] sm:$0xff]
    %v109 = vld [vmem:[%s5 + $0x38] sm:$0xff]
    %v110 = vld [vmem:[%s6] sm:$0x1]
    %v112 = vperm.slane %v110, 0
    %vm114 = vcmask 523264
    %v116 = vsel %vm114, %v101, 0
    %118 = vmatpush.msra.mxu0 0.0
    %119 = vmatpush.msra.mxu0 0.0
    %120 = vmatpush.msra.mxu0 0.0
    %121 = vmatpush.msra.mxu0 0.0
    %122 = vmatpush.msra.mxu0 0.0
    %123 = vmatpush.msra.mxu0 0.0
    %124 = vmatpush.msra.mxu0 0.0
    %125 = vmatpush.msra.mxu0 0.0
    %126 = vmatpush.msra.mxu0 %v109
    %127 = vmatpush.msra.mxu0 %v108
    %128 = vmatpush.msra.mxu0 %v107
    %129 = vmatpush.msra.mxu0 %v106
    %130 = vmatpush.msra.mxu0 %v105
    %131 = vmatpush.msra.mxu0 %v104
    %132 = vmatpush.msra.mxu0 %v103
    %133 = vmatpush.msra.mxu0 %v102
    %134 = vmatmul.f32.gmra.mxu0 %v116
    %v135 = vpop.f32.mrf.mxu0
    %v136 = vadd.f32 %v112, %v135
    %137 = vdwg.mxu0
    %vm138 = vcmask 130048
    %139 = vst.msk [vmem:[#allocation2] sm:$0xff] %vm138, %v136
    // Predicated region
    $region30: #{tpu_custom_call.1} parent=1 // pred_check
      _
    $region31: #{tpu_custom_call.1} parent=1 // pred_check_branch
      %141 = sbr.rel (0) target = $region33
    $region32: #{tpu_custom_call.1} parent=1 // pred_region
      %143 = vsyncadd [#allocation3], 0
      %s145 = sshll.u32 [#allocation2], 4
      %s146 = int_to_ptr.vmem [resolvable:$true] %s145
      %s147 = sshll.u32 %s7, 4
      %s148 = int_to_ptr.hbm [resolvable:$true] %s147
      %150 = dma.vmem_to_hbm [thread:$0]  %s146, 128, %s148, [#allocation3]
    $region33: #{tpu_custom_call.1} parent=1 // pred_fallthru
      _
    // Predicated region
    $region34: #{tpu_custom_call.1} parent=1 // pred_check
      _
    $region35: #{tpu_custom_call.1} parent=1 // pred_check_branch
      %152 = sbr.rel (0) target = $region37
    $region36: #{tpu_custom_call.1} parent=1 // pred_region
      %154 = dma.done [#allocation3], 128
    $region37: #{tpu_custom_call.1} parent=1 // pred_fallthru
      _
    %155 = vsyncpa [#allocation3], 1

</llo_original>
